<compile_context>
chip_gen: v7x
topology: tpu7x:2x2x1
jax: 0.10.0
libtpu: 0.0.40
codegen_flags: <defaults>
</compile_context>

<pallas_src>
import jax
import jax.numpy as jnp
from jax.experimental import pallas as pl
from jax.experimental.pallas import tpu as pltpu

LANE = 128
NUM_CLASSES = 5


def _round_up(n, m):
    return (n + m - 1) // m * m


def ffnn_kernel(x_ref, w1_ref, b1_ref, w2_ref, b2_ref, o_ref):
    # x: (TB, Dp), w1: (Dp, Hp), b1: (1, Hp), w2: (Hp, Cp), b2: (1, Cp), o: (TB, Cp)
    x = x_ref[...]
    h = jnp.dot(x, w1_ref[...], preferred_element_type=jnp.float32) + b1_ref[...]
    h = jnp.maximum(h, 0.0)                                    # ReLU
    z = jnp.dot(h, w2_ref[...], preferred_element_type=jnp.float32) + b2_ref[...]
    # numerically-stable log-softmax over the (lane-dense, padded) class axis;
    # padded classes carry a -1e30 bias so exp(...) underflows to exactly 0.
    m = jnp.max(z, axis=-1, keepdims=True)
    s = z - m
    lse = jnp.log(jnp.sum(jnp.exp(s), axis=-1, keepdims=True))
    o_ref[...] = (s - lse).astype(o_ref.dtype)


def ffnn_forward(x, w1_t, b1, w2_t, b2, *, tb=128):
    """x: (D,) or (B, D) float32 -> (5,) or (B, 5) float32 log-probabilities."""
    squeeze = x.ndim == 1
    if squeeze:
        x = x[None, :]
    B, D = x.shape
    H = w1_t.shape[1]

    Dp = _round_up(D, LANE)
    Hp = _round_up(H, LANE)
    Cp = LANE                       # classes padded 5 -> 128 for lane-dense stores
    Bp = _round_up(B, tb)           # batch padded to a whole number of tiles

    # Zero-pad inputs/weights (exact for Linear+ReLU); padded classes get a huge
    # negative bias so they vanish from the softmax normalizer.
    x_p = jnp.zeros((Bp, Dp), jnp.float32).at[:B, :D].set(x.astype(jnp.float32))
    w1_p = jnp.zeros((Dp, Hp), jnp.float32).at[:D, :H].set(w1_t)
    b1_p = jnp.zeros((1, Hp), jnp.float32).at[0, :H].set(b1)
    w2_p = jnp.zeros((Hp, Cp), jnp.float32).at[:H, :NUM_CLASSES].set(w2_t)
    b2_p = jnp.full((1, Cp), -1e30, jnp.float32).at[0, :NUM_CLASSES].set(b2)

    out = pl.pallas_call(
        ffnn_kernel,
        out_shape=jax.ShapeDtypeStruct((Bp, Cp), jnp.float32),
        grid=(Bp // tb,),
        in_specs=[
            pl.BlockSpec((tb, Dp), lambda i: (i, 0)),   # batch tile
            pl.BlockSpec((Dp, Hp), lambda i: (0, 0)),   # W1: resident across grid
            pl.BlockSpec((1, Hp), lambda i: (0, 0)),    # b1: resident
            pl.BlockSpec((Hp, Cp), lambda i: (0, 0)),   # W2: resident
            pl.BlockSpec((1, Cp), lambda i: (0, 0)),    # b2: resident
        ],
        out_specs=pl.BlockSpec((tb, Cp), lambda i: (i, 0)),
        compiler_params=pltpu.CompilerParams(
            dimension_semantics=("parallel",)),
    )(x_p, w1_p, b1_p, w2_p, b2_p)

    out = out[:B, :NUM_CLASSES]
    if squeeze:
        out = out[0]
    return out


def init_params(key, input_dim, h):
    """Deterministic init matching nn.Linear's default (Kaiming-uniform-ish)."""
    k1, k2, k3, k4 = jax.random.split(key, 4)
    bound1 = 1.0 / jnp.sqrt(input_dim)
    bound2 = 1.0 / jnp.sqrt(h)
    # PyTorch stores W1 as (h, input_dim); we store the transpose (input_dim, h).
    w1_t = jax.random.uniform(k1, (input_dim, h), jnp.float32, -bound1, bound1)
    b1 = jax.random.uniform(k2, (h,), jnp.float32, -bound1, bound1)
    w2_t = jax.random.uniform(k3, (h, NUM_CLASSES), jnp.float32, -bound2, bound2)
    b2 = jax.random.uniform(k4, (NUM_CLASSES,), jnp.float32, -bound2, bound2)
    return w1_t, b1, w2_t, b2


if __name__ == "__main__":
    input_dim = 32
    hidden = 32
    batch = 8

    key = jax.random.PRNGKey(0)
    kx, kp = jax.random.split(key)
    xb = jax.random.normal(kx, (batch, input_dim), jnp.float32)
    w1_t, b1, w2_t, b2 = init_params(kp, input_dim, hidden)

    # batched path
    log_probs = ffnn_forward(xb, w1_t, b1, w2_t, b2)
    jax.block_until_ready(log_probs)

    # pure-JAX reference (same math as the PyTorch forward)
    def ref(x):
        h = jnp.maximum(x @ w1_t + b1, 0.0)
        z = h @ w2_t + b2
        return jax.nn.log_softmax(z, axis=-1)

    expected = ref(xb)
    assert log_probs.shape == (batch, NUM_CLASSES)
    assert jnp.allclose(jnp.sum(jnp.exp(log_probs), axis=-1), 1.0, atol=1e-5)
    assert jnp.allclose(log_probs, expected, atol=1e-5, rtol=1e-5)

    # single-vector path (original module semantics: 1-D in -> (5,) log-probs out)
    single = ffnn_forward(xb[0], w1_t, b1, w2_t, b2)
    jax.block_until_ready(single)
    assert single.shape == (NUM_CLASSES,)
    assert jnp.allclose(single, expected[0], atol=1e-5, rtol=1e-5)

    print("KERNEL_OK")
</pallas_src>

<mosaic_0001>
module attributes {stable_mosaic.version = 11 : i64} {
  func.func @ffnn_kernel(%arg0: i32, %arg1: memref<128x128xf32, #tpu.memory_space<vmem>>, %arg2: memref<128x128xf32, #tpu.memory_space<vmem>>, %arg3: memref<1x128xf32, #tpu.memory_space<vmem>>, %arg4: memref<128x128xf32, #tpu.memory_space<vmem>>, %arg5: memref<1x128xf32, #tpu.memory_space<vmem>>, %arg6: memref<128x128xf32, #tpu.memory_space<vmem>>) attributes {dimension_semantics = [#tpu.dimension_semantics<parallel>], iteration_bounds = array<i64: 1>, scalar_prefetch = 0 : i64, scratch_operands = 0 : i64, tpu.core_type = #tpu.core_type<tc>, window_params = [{transform_indices = @transform_0, window_bounds = array<i64: 128, 128>}, {pipeline_mode = #tpu.pipeline_mode<synchronous>, transform_indices = @transform_1, window_bounds = array<i64: 128, 128>}, {pipeline_mode = #tpu.pipeline_mode<synchronous>, transform_indices = @transform_2, window_bounds = array<i64: 1, 128>}, {pipeline_mode = #tpu.pipeline_mode<synchronous>, transform_indices = @transform_3, window_bounds = array<i64: 128, 128>}, {pipeline_mode = #tpu.pipeline_mode<synchronous>, transform_indices = @transform_4, window_bounds = array<i64: 1, 128>}, {transform_indices = @transform_5, window_bounds = array<i64: 128, 128>}]} {
    %c0 = arith.constant 0 : index
    %c0_0 = arith.constant 0 : index
    %0 = vector.load %arg1[%c0, %c0_0] : memref<128x128xf32, #tpu.memory_space<vmem>>, vector<128x128xf32>
    %c0_1 = arith.constant 0 : index
    %c0_2 = arith.constant 0 : index
    %1 = vector.load %arg2[%c0_1, %c0_2] : memref<128x128xf32, #tpu.memory_space<vmem>>, vector<128x128xf32>
    %cst = arith.constant dense<0.000000e+00> : vector<128x128xf32>
    %2 = tpu.matmul %0, %1, %cst {dimension_numbers = #tpu.dot_dimension_numbers<[1], [0], [0], [1], [0, 0, 1, 1], [], []>} : vector<128x128xf32>, vector<128x128xf32>, vector<128x128xf32> -> vector<128x128xf32>
    %c0_3 = arith.constant 0 : index
    %c0_4 = arith.constant 0 : index
    %3 = vector.load %arg3[%c0_3, %c0_4] : memref<1x128xf32, #tpu.memory_space<vmem>>, vector<1x128xf32>
    %4 = vector.broadcast %3 : vector<1x128xf32> to vector<128x128xf32>
    %5 = arith.addf %2, %4 : vector<128x128xf32>
    %cst_5 = arith.constant 0.000000e+00 : f32
    %6 = vector.broadcast %cst_5 : f32 to vector<128x128xf32>
    %7 = arith.maximumf %5, %6 : vector<128x128xf32>
    %c0_6 = arith.constant 0 : index
    %c0_7 = arith.constant 0 : index
    %8 = vector.load %arg4[%c0_6, %c0_7] : memref<128x128xf32, #tpu.memory_space<vmem>>, vector<128x128xf32>
    %cst_8 = arith.constant dense<0.000000e+00> : vector<128x128xf32>
    %9 = tpu.matmul %7, %8, %cst_8 {dimension_numbers = #tpu.dot_dimension_numbers<[1], [0], [0], [1], [0, 0, 1, 1], [], []>} : vector<128x128xf32>, vector<128x128xf32>, vector<128x128xf32> -> vector<128x128xf32>
    %c0_9 = arith.constant 0 : index
    %c0_10 = arith.constant 0 : index
    %10 = vector.load %arg5[%c0_9, %c0_10] : memref<1x128xf32, #tpu.memory_space<vmem>>, vector<1x128xf32>
    %11 = vector.broadcast %10 : vector<1x128xf32> to vector<128x128xf32>
    %12 = arith.addf %9, %11 : vector<128x128xf32>
    %cst_11 = arith.constant dense<0xFF800000> : vector<128xf32>
    %13 = vector.multi_reduction <maximumf>, %12, %cst_11 [1] : vector<128x128xf32> to vector<128xf32>
    %14 = vector.shape_cast %13 : vector<128xf32> to vector<128x1xf32>
    %15 = vector.broadcast %14 : vector<128x1xf32> to vector<128x128xf32>
    %16 = arith.subf %12, %15 : vector<128x128xf32>
    %17 = math.exp %16 : vector<128x128xf32>
    %cst_12 = arith.constant dense<0.000000e+00> : vector<128xf32>
    %18 = vector.multi_reduction <add>, %17, %cst_12 [1] : vector<128x128xf32> to vector<128xf32>
    %19 = vector.shape_cast %18 : vector<128xf32> to vector<128x1xf32>
    %20 = math.log %19 : vector<128x1xf32>
    %21 = vector.broadcast %20 : vector<128x1xf32> to vector<128x128xf32>
    %22 = arith.subf %16, %21 : vector<128x128xf32>
    %c0_13 = arith.constant 0 : index
    %c0_14 = arith.constant 0 : index
    %23 = vector.load %arg6[%c0_13, %c0_14] : memref<128x128xf32, #tpu.memory_space<vmem>>, vector<128x128xf32>
    tpu.vector_store %arg6[%c0_13, %c0_14], %22 {strides = array<i32>} : memref<128x128xf32, #tpu.memory_space<vmem>>, vector<128x128xf32>,
    return
  }
  func.func @transform_0(%arg0: i32) -> (i32, i32) {
    %c0_i32 = arith.constant 0 : i32
    %c0_i32_0 = arith.constant 0 : i32
    return %arg0, %c0_i32 : i32, i32
  }
  func.func @transform_1(%arg0: i32) -> (i32, i32) {
    %c0_i32 = arith.constant 0 : i32
    %c0_i32_0 = arith.constant 0 : i32
    %c0_i32_1 = arith.constant 0 : i32
    return %c0_i32, %c0_i32_0 : i32, i32
  }
  func.func @transform_2(%arg0: i32) -> (i32, i32) {
    %c0_i32 = arith.constant 0 : i32
    %c0_i32_0 = arith.constant 0 : i32
    %c0_i32_1 = arith.constant 0 : i32
    return %c0_i32, %c0_i32_0 : i32, i32
  }
  func.func @transform_3(%arg0: i32) -> (i32, i32) {
    %c0_i32 = arith.constant 0 : i32
    %c0_i32_0 = arith.constant 0 : i32
    %c0_i32_1 = arith.constant 0 : i32
    return %c0_i32, %c0_i32_0 : i32, i32
  }
  func.func @transform_4(%arg0: i32) -> (i32, i32) {
    %c0_i32 = arith.constant 0 : i32
    %c0_i32_0 = arith.constant 0 : i32
    %c0_i32_1 = arith.constant 0 : i32
    return %c0_i32, %c0_i32_0 : i32, i32
  }
  func.func @transform_5(%arg0: i32) -> (i32, i32) {
    %c0_i32 = arith.constant 0 : i32
    %c0_i32_0 = arith.constant 0 : i32
    return %arg0, %c0_i32 : i32, i32
  }
}

</mosaic_0001>

<llo_original>
// kernel: tpu_custom_call.1
$region0: #{tpu_custom_call.1}
  #allocation0 [shape = 'u32[]', space=smem, size = 0x4, offset = 0x4, fixed_abs, tag = 'smem constant byte address 0x4 - core index']
  #allocation1 [shape = 'u32[144,128]{1,0:T(1,128)}', space=vmem, size = 0x12000, scoped, tag = 'internal scratch']
  %s0 = inlined_call_operand.hbm [shape: f32[128,128], index: 0, kind: input, shape index: {}]
  %s1 = inlined_call_operand.hbm [shape: f32[128,128], index: 1, kind: input, shape index: {}]
  %s2 = inlined_call_operand.vmem [shape: f32[1,128], index: 2, kind: input, shape index: {}]
  %s3 = inlined_call_operand.hbm [shape: f32[128,128], index: 3, kind: input, shape index: {}]
  %s4 = inlined_call_operand.vmem [shape: f32[1,128], index: 4, kind: input, shape index: {}]
  %s5 = inlined_call_operand.hbm [shape: f32[128,128], index: 5, kind: output, shape index: {}]
  %s6 = sld [smem:[#allocation0]]
  $region42: #{tpu_custom_call.1} parent=0
    _
  %s8 = ssub.s32 1, %s6
  %s9 = scalar_select 0, %s8, %s6
  $region1: #{tpu_custom_call.1} parent=0
    #allocation2 [shape = 'u8[65536]{0}', space=vmem, size = 0x10000, scoped, tag = 'input window, operand 0, single buffered']
    #allocation3 [shape = 's32[1]{0}', space=sflag, size = 0x4, scoped, tag = 'scoped memory for tpu_custom_call.1']
    #allocation4 [shape = 's32[1]{0}', space=sflag, size = 0x4, scoped, tag = 'scoped memory for tpu_custom_call.1']
    #allocation5 [shape = 'u8[65536]{0}', space=vmem, size = 0x10000, scoped, tag = 'input window, operand 1, single buffered']
    #allocation6 [shape = 's32[1]{0}', space=sflag, size = 0x4, scoped, tag = 'scoped memory for tpu_custom_call.1']
    #allocation7 [shape = 'u8[65536]{0}', space=vmem, size = 0x10000, scoped, tag = 'input window, operand 3, single buffered']
    #allocation8 [shape = 'u8[65536]{0}', space=vmem, size = 0x10000, scoped, tag = 'output window, operand 0, single buffered']
    %10 = vsyncpa [#allocation3], 0
    %11 = vsyncpa [#allocation6], 0
    %12 = vsyncpa [#allocation4], 0
    // Predicated region
    $region2: #{tpu_custom_call.1} parent=1 // pred_check
      _
    $region3: #{tpu_custom_call.1} parent=1 // pred_check_branch
      %14 = sbr.rel (0) target = $region5
    $region4: #{tpu_custom_call.1} parent=1 // pred_region
      %s16 = ssub.s32 2048, 2048
      %17 = vsyncadd [#allocation3], %s16
      %s18 = sshll.u32 [#allocation2], 4
      %s19 = int_to_ptr.vmem [resolvable:$true] %s18
      %24 = dma.hbm_to_vmem [thread:$0]  %s0, 2048, %s19, [#allocation3], 128, 128, 8
    $region5: #{tpu_custom_call.1} parent=1 // pred_fallthru
      _
    // Predicated region
    $region6: #{tpu_custom_call.1} parent=1 // pred_check
      _
    $region7: #{tpu_custom_call.1} parent=1 // pred_check_branch
      %26 = sbr.rel (0) target = $region9
    $region8: #{tpu_custom_call.1} parent=1 // pred_region
      %s28 = ssub.s32 2048, 2048
      %29 = vsyncadd [#allocation6], %s28
      %s30 = sshll.u32 [#allocation5], 4
      %s31 = int_to_ptr.vmem [resolvable:$true] %s30
      %36 = dma.hbm_to_vmem [thread:$0]  %s1, 2048, %s31, [#allocation6], 128, 128, 8
    $region9: #{tpu_custom_call.1} parent=1 // pred_fallthru
      _
    // Predicated region
    $region10: #{tpu_custom_call.1} parent=1 // pred_check
      _
    $region11: #{tpu_custom_call.1} parent=1 // pred_check_branch
      %38 = sbr.rel (0) target = $region13
    $region12: #{tpu_custom_call.1} parent=1 // pred_region
      _
    $region13: #{tpu_custom_call.1} parent=1 // pred_fallthru
      _
    // Predicated region
    $region14: #{tpu_custom_call.1} parent=1 // pred_check
      _
    $region15: #{tpu_custom_call.1} parent=1 // pred_check_branch
      %40 = sbr.rel (0) target = $region17
    $region16: #{tpu_custom_call.1} parent=1 // pred_region
      %s42 = ssub.s32 2048, 2048
      %43 = vsyncadd [#allocation6], %s42
      %s44 = sshll.u32 [#allocation7], 4
      %s45 = int_to_ptr.vmem [resolvable:$true] %s44
      %50 = dma.hbm_to_vmem [thread:$0]  %s3, 2048, %s45, [#allocation6], 128, 128, 8
    $region17: #{tpu_custom_call.1} parent=1 // pred_fallthru
      _
    // Predicated region
    $region18: #{tpu_custom_call.1} parent=1 // pred_check
      _
    $region19: #{tpu_custom_call.1} parent=1 // pred_check_branch
      %52 = sbr.rel (0) target = $region21
    $region20: #{tpu_custom_call.1} parent=1 // pred_region
      _
    $region21: #{tpu_custom_call.1} parent=1 // pred_fallthru
      _
    // Predicated region
    $region22: #{tpu_custom_call.1} parent=1 // pred_check
      _
    $region23: #{tpu_custom_call.1} parent=1 // pred_check_branch
      %54 = sbr.rel (0) target = $region25
    $region24: #{tpu_custom_call.1} parent=1 // pred_region
      %55 = dma.done [#allocation3], 2048
    $region25: #{tpu_custom_call.1} parent=1 // pred_fallthru
      _
    // Predicated region
    $region26: #{tpu_custom_call.1} parent=1 // pred_check
      _
    $region27: #{tpu_custom_call.1} parent=1 // pred_check_branch
      %57 = sbr.rel (0) target = $region29
    $region28: #{tpu_custom_call.1} parent=1 // pred_region
      %58 = dma.done [#allocation6], 2048
    $region29: #{tpu_custom_call.1} parent=1 // pred_fallthru
      _
    // Predicated region
    $region30: #{tpu_custom_call.1} parent=1 // pred_check
      _
    $region31: #{tpu_custom_call.1} parent=1 // pred_check_branch
      %60 = sbr.rel (0) target = $region33
    $region32: #{tpu_custom_call.1} parent=1 // pred_region
      %61 = dma.done [#allocation6], 2048
    $region33: #{tpu_custom_call.1} parent=1 // pred_fallthru
      _
    %v62 = vld [vmem:[#allocation2] sm:$0xff]
    %v63 = vld [vmem:[#allocation2 + $0x8] sm:$0xff]
    %v64 = vld [vmem:[#allocation2 + $0x10] sm:$0xff]
    %v65 = vld [vmem:[#allocation2 + $0x18] sm:$0xff]
    %v66 = vld [vmem:[#allocation2 + $0x20] sm:$0xff]
    %v67 = vld [vmem:[#allocation2 + $0x28] sm:$0xff]
    %v68 = vld [vmem:[#allocation2 + $0x30] sm:$0xff]
    %v69 = vld [vmem:[#allocation2 + $0x38] sm:$0xff]
    %v70 = vld [vmem:[#allocation2 + $0x40] sm:$0xff]
    %v71 = vld [vmem:[#allocation2 + $0x48] sm:$0xff]
    %v72 = vld [vmem:[#allocation2 + $0x50] sm:$0xff]
    %v73 = vld [vmem:[#allocation2 + $0x58] sm:$0xff]
    %v74 = vld [vmem:[#allocation2 + $0x60] sm:$0xff]
    %v75 = vld [vmem:[#allocation2 + $0x68] sm:$0xff]
    %v76 = vld [vmem:[#allocation2 + $0x70] sm:$0xff]
    %v77 = vld [vmem:[#allocation2 + $0x78] sm:$0xff]
    %v78 = vld [vmem:[#allocation5] sm:$0xff]
    %v79 = vld [vmem:[#allocation5 + $0x8] sm:$0xff]
    %v80 = vld [vmem:[#allocation5 + $0x10] sm:$0xff]
    %v81 = vld [vmem:[#allocation5 + $0x18] sm:$0xff]
    %v82 = vld [vmem:[#allocation5 + $0x20] sm:$0xff]
    %v83 = vld [vmem:[#allocation5 + $0x28] sm:$0xff]
    %v84 = vld [vmem:[#allocation5 + $0x30] sm:$0xff]
    %v85 = vld [vmem:[#allocation5 + $0x38] sm:$0xff]
    %v86 = vld [vmem:[#allocation5 + $0x40] sm:$0xff]
    %v87 = vld [vmem:[#allocation5 + $0x48] sm:$0xff]
    %v88 = vld [vmem:[#allocation5 + $0x50] sm:$0xff]
    %v89 = vld [vmem:[#allocation5 + $0x58] sm:$0xff]
    %v90 = vld [vmem:[#allocation5 + $0x60] sm:$0xff]
    %v91 = vld [vmem:[#allocation5 + $0x68] sm:$0xff]
    %v92 = vld [vmem:[#allocation5 + $0x70] sm:$0xff]
    %v93 = vld [vmem:[#allocation5 + $0x78] sm:$0xff]
    %v94 = vld [vmem:[%s2] sm:$0x1]
    %v96 = vlaneseq
    %v97 = vshrl.u32 %v96, 7
    %v98 = vsub.s32 0, %v97
    %v99 = vrot.slane %v94, %v98
    %101 = vmatprep.subr.mxu0 0.0
    %102 = vmatpush1.msra.mxu0 %v78
    %103 = vmatprep.subr.mxu0 0.0
    %104 = vmatpush1.msra.mxu0 %v79
    %105 = vmatprep.subr.mxu0 0.0
    %106 = vmatpush1.msra.mxu0 %v80
    %107 = vmatprep.subr.mxu0 0.0
    %108 = vmatpush1.msra.mxu0 %v81
    %109 = vmatprep.subr.mxu0 0.0
    %110 = vmatpush1.msra.mxu0 %v82
    %111 = vmatprep.subr.mxu0 0.0
    %112 = vmatpush1.msra.mxu0 %v83
    %113 = vmatprep.subr.mxu0 0.0
    %114 = vmatpush1.msra.mxu0 %v84
    %115 = vmatprep.subr.mxu0 0.0
    %116 = vmatpush1.msra.mxu0 %v85
    %117 = vmatprep.subr.mxu0 0.0
    %118 = vmatpush1.msra.mxu0 %v86
    %119 = vmatprep.subr.mxu0 0.0
    %120 = vmatpush1.msra.mxu0 %v87
    %121 = vmatprep.subr.mxu0 0.0
    %122 = vmatpush1.msra.mxu0 %v88
    %123 = vmatprep.subr.mxu0 0.0
    %124 = vmatpush1.msra.mxu0 %v89
    %125 = vmatprep.subr.mxu0 0.0
    %126 = vmatpush1.msra.mxu0 %v90
    %127 = vmatprep.subr.mxu0 0.0
    %128 = vmatpush1.msra.mxu0 %v91
    %129 = vmatprep.subr.mxu0 0.0
    %130 = vmatpush1.msra.mxu0 %v92
    %131 = vmatprep.subr.mxu0 0.0
    %132 = vmatpush1.msra.mxu0 %v93
    %133 = vmatprep.subr.mxu0 0.0
    %134 = vmatpush1.msra.mxu0 0.0
    %135 = vmatprep.subr.mxu0 0.0
    %136 = vmatpush1.msra.mxu0 0.0
    %137 = vmatprep.subr.mxu0 0.0
    %138 = vmatpush1.msra.mxu0 0.0
    %139 = vmatprep.subr.mxu0 0.0
    %140 = vmatpush1.msra.mxu0 0.0
    %141 = vmatprep.subr.mxu0 0.0
    %142 = vmatpush1.msra.mxu0 0.0
    %143 = vmatprep.subr.mxu0 0.0
    %144 = vmatpush1.msra.mxu0 0.0
    %145 = vmatprep.subr.mxu0 0.0
    %146 = vmatpush1.msra.mxu0 0.0
    %147 = vmatprep.subr.mxu0 0.0
    %148 = vmatpush1.msra.mxu0 0.0
    %149 = vmatprep.subr.mxu0 0.0
    %150 = vmatpush1.msra.mxu0 0.0
    %151 = vmatprep.subr.mxu0 0.0
    %152 = vmatpush1.msra.mxu0 0.0
    %153 = vmatprep.subr.mxu0 0.0
    %154 = vmatpush1.msra.mxu0 0.0
    %155 = vmatprep.subr.mxu0 0.0
    %156 = vmatpush1.msra.mxu0 0.0
    %157 = vmatprep.subr.mxu0 0.0
    %158 = vmatpush1.msra.mxu0 0.0
    %159 = vmatprep.subr.mxu0 0.0
    %160 = vmatpush1.msra.mxu0 0.0
    %161 = vmatprep.subr.mxu0 0.0
    %162 = vmatpush1.msra.mxu0 0.0
    %163 = vmatprep.subr.mxu0 0.0
    %164 = vmatpush1.msra.mxu0 0.0
    %165 = vmatprep.mubr.f32.mxu0 0.0
    %166 = vmatmul.mubr.f32.gmra.mrb[0].mxu0 %v62
    %v167 = vpop.f32.mrb[0].mxu0
    %v168 = vadd.f32 %v99, %v167
    %v169 = vpop.f32.mrb[0].mxu0
    %170 = vmatprep.mubr.f32.mxu0 0.0
    %171 = vmatmul.mubr.f32.gmra.mrb[0].mxu0 %v63
    %v172 = vpop.f32.mrb[0].mxu0
    %v173 = vadd.f32 %v99, %v172
    %v174 = vpop.f32.mrb[0].mxu0
    %175 = vmatprep.mubr.f32.mxu0 0.0
    %176 = vmatmul.mubr.f32.gmra.mrb[0].mxu0 %v64
    %v177 = vpop.f32.mrb[0].mxu0
    %v178 = vadd.f32 %v99, %v177
    %v179 = vpop.f32.mrb[0].mxu0
    %180 = vmatprep.mubr.f32.mxu0 0.0
    %181 = vmatmul.mubr.f32.gmra.mrb[0].mxu0 %v65
    %v182 = vpop.f32.mrb[0].mxu0
    %v183 = vadd.f32 %v99, %v182
    %v184 = vpop.f32.mrb[0].mxu0
    %185 = vmatprep.mubr.f32.mxu0 0.0
    %186 = vmatmul.mubr.f32.gmra.mrb[0].mxu0 %v66
    %v187 = vpop.f32.mrb[0].mxu0
    %v188 = vadd.f32 %v99, %v187
    %v189 = vpop.f32.mrb[0].mxu0
    %190 = vmatprep.mubr.f32.mxu0 0.0
    %191 = vmatmul.mubr.f32.gmra.mrb[0].mxu0 %v67
    %v192 = vpop.f32.mrb[0].mxu0
    %v193 = vadd.f32 %v99, %v192
    %v194 = vpop.f32.mrb[0].mxu0
    %195 = vmatprep.mubr.f32.mxu0 0.0
    %196 = vmatmul.mubr.f32.gmra.mrb[0].mxu0 %v68
    %v197 = vpop.f32.mrb[0].mxu0
    %v198 = vadd.f32 %v99, %v197
    %v199 = vpop.f32.mrb[0].mxu0
    %200 = vmatprep.mubr.f32.mxu0 0.0
    %201 = vmatmul.mubr.f32.gmra.mrb[0].mxu0 %v69
    %v202 = vpop.f32.mrb[0].mxu0
    %v203 = vadd.f32 %v99, %v202
    %v204 = vpop.f32.mrb[0].mxu0
    %205 = vmatprep.mubr.f32.mxu0 0.0
    %206 = vmatmul.mubr.f32.gmra.mrb[0].mxu0 %v70
    %v207 = vpop.f32.mrb[0].mxu0
    %v208 = vadd.f32 %v99, %v207
    %v209 = vpop.f32.mrb[0].mxu0
    %210 = vmatprep.mubr.f32.mxu0 0.0
    %211 = vmatmul.mubr.f32.gmra.mrb[0].mxu0 %v71
    %v212 = vpop.f32.mrb[0].mxu0
    %v213 = vadd.f32 %v99, %v212
    %v214 = vpop.f32.mrb[0].mxu0
    %215 = vmatprep.mubr.f32.mxu0 0.0
    %216 = vmatmul.mubr.f32.gmra.mrb[0].mxu0 %v72
    %v217 = vpop.f32.mrb[0].mxu0
    %v218 = vadd.f32 %v99, %v217
    %v219 = vpop.f32.mrb[0].mxu0
    %220 = vmatprep.mubr.f32.mxu0 0.0
    %221 = vmatmul.mubr.f32.gmra.mrb[0].mxu0 %v73
    %v222 = vpop.f32.mrb[0].mxu0
    %v223 = vadd.f32 %v99, %v222
    %v224 = vpop.f32.mrb[0].mxu0
    %225 = vmatprep.mubr.f32.mxu0 0.0
    %226 = vmatmul.mubr.f32.gmra.mrb[0].mxu0 %v74
    %v227 = vpop.f32.mrb[0].mxu0
    %v228 = vadd.f32 %v99, %v227
    %v229 = vpop.f32.mrb[0].mxu0
    %230 = vmatprep.mubr.f32.mxu0 0.0
    %231 = vmatmul.mubr.f32.gmra.mrb[0].mxu0 %v75
    %v232 = vpop.f32.mrb[0].mxu0
    %v233 = vadd.f32 %v99, %v232
    %v234 = vpop.f32.mrb[0].mxu0
    %235 = vmatprep.mubr.f32.mxu0 0.0
    %236 = vmatmul.mubr.f32.gmra.mrb[0].mxu0 %v76
    %v237 = vpop.f32.mrb[0].mxu0
    %v238 = vadd.f32 %v99, %v237
    %v239 = vpop.f32.mrb[0].mxu0
    %240 = vmatprep.mubr.f32.mxu0 0.0
    %241 = vmatmul.mubr.f32.gmra.mrb[0].mxu0 %v77
    %v242 = vpop.f32.mrb[0].mxu0
    %v243 = vadd.f32 %v99, %v242
    %v244 = vpop.f32.mrb[0].mxu0
    %245 = vdwg.mxu0
    %v246 = vmax.f32 %v168, 0.0
    %v247 = vmax.f32 %v173, 0.0
    %v248 = vmax.f32 %v178, 0.0
    %v249 = vmax.f32 %v183, 0.0
    %v250 = vmax.f32 %v188, 0.0
    %v251 = vmax.f32 %v193, 0.0
    %v252 = vmax.f32 %v198, 0.0
    %v253 = vmax.f32 %v203, 0.0
    %v254 = vmax.f32 %v208, 0.0
    %v255 = vmax.f32 %v213, 0.0
    %v256 = vmax.f32 %v218, 0.0
    %v257 = vmax.f32 %v223, 0.0
    %v258 = vmax.f32 %v228, 0.0
    %v259 = vmax.f32 %v233, 0.0
    %v260 = vmax.f32 %v238, 0.0
    %v261 = vmax.f32 %v243, 0.0
    %v262 = vld [vmem:[#allocation7] sm:$0xff]
    %v263 = vld [vmem:[#allocation7 + $0x8] sm:$0xff]
    %v264 = vld [vmem:[#allocation7 + $0x10] sm:$0xff]
    %v265 = vld [vmem:[#allocation7 + $0x18] sm:$0xff]
    %v266 = vld [vmem:[#allocation7 + $0x20] sm:$0xff]
    %v267 = vld [vmem:[#allocation7 + $0x28] sm:$0xff]
    %v268 = vld [vmem:[#allocation7 + $0x30] sm:$0xff]
    %v269 = vld [vmem:[#allocation7 + $0x38] sm:$0xff]
    %v270 = vld [vmem:[#allocation7 + $0x40] sm:$0xff]
    %v271 = vld [vmem:[#allocation7 + $0x48] sm:$0xff]
    %v272 = vld [vmem:[#allocation7 + $0x50] sm:$0xff]
    %v273 = vld [vmem:[#allocation7 + $0x58] sm:$0xff]
    %v274 = vld [vmem:[#allocation7 + $0x60] sm:$0xff]
    %v275 = vld [vmem:[#allocation7 + $0x68] sm:$0xff]
    %v276 = vld [vmem:[#allocation7 + $0x70] sm:$0xff]
    %v277 = vld [vmem:[#allocation7 + $0x78] sm:$0xff]
    %v278 = vld [vmem:[%s4] sm:$0x1]
    %v280 = vlaneseq
    %v281 = vshrl.u32 %v280, 7
    %v282 = vsub.s32 0, %v281
    %v283 = vrot.slane %v278, %v282
    %285 = vmatprep.subr.mxu0 0.0
    %286 = vmatpush1.msra.mxu0 %v262
    %287 = vmatprep.subr.mxu0 0.0
    %288 = vmatpush1.msra.mxu0 %v263
    %289 = vmatprep.subr.mxu0 0.0
    %290 = vmatpush1.msra.mxu0 %v264
    %291 = vmatprep.subr.mxu0 0.0
    %292 = vmatpush1.msra.mxu0 %v265
    %293 = vmatprep.subr.mxu0 0.0
    %294 = vmatpush1.msra.mxu0 %v266
    %295 = vmatprep.subr.mxu0 0.0
    %296 = vmatpush1.msra.mxu0 %v267
    %297 = vmatprep.subr.mxu0 0.0
    %298 = vmatpush1.msra.mxu0 %v268
    %299 = vmatprep.subr.mxu0 0.0
    %300 = vmatpush1.msra.mxu0 %v269
    %301 = vmatprep.subr.mxu0 0.0
    %302 = vmatpush1.msra.mxu0 %v270
    %303 = vmatprep.subr.mxu0 0.0
    %304 = vmatpush1.msra.mxu0 %v271
    %305 = vmatprep.subr.mxu0 0.0
    %306 = vmatpush1.msra.mxu0 %v272
    %307 = vmatprep.subr.mxu0 0.0
    %308 = vmatpush1.msra.mxu0 %v273
    %309 = vmatprep.subr.mxu0 0.0
    %310 = vmatpush1.msra.mxu0 %v274
    %311 = vmatprep.subr.mxu0 0.0
    %312 = vmatpush1.msra.mxu0 %v275
    %313 = vmatprep.subr.mxu0 0.0
    %314 = vmatpush1.msra.mxu0 %v276
    %315 = vmatprep.subr.mxu0 0.0
    %316 = vmatpush1.msra.mxu0 %v277
    %317 = vmatprep.subr.mxu0 0.0
    %318 = vmatpush1.msra.mxu0 0.0
    %319 = vmatprep.subr.mxu0 0.0
    %320 = vmatpush1.msra.mxu0 0.0
    %321 = vmatprep.subr.mxu0 0.0
    %322 = vmatpush1.msra.mxu0 0.0
    %323 = vmatprep.subr.mxu0 0.0
    %324 = vmatpush1.msra.mxu0 0.0
    %325 = vmatprep.subr.mxu0 0.0
    %326 = vmatpush1.msra.mxu0 0.0
    %327 = vmatprep.subr.mxu0 0.0
    %328 = vmatpush1.msra.mxu0 0.0
    %329 = vmatprep.subr.mxu0 0.0
    %330 = vmatpush1.msra.mxu0 0.0
    %331 = vmatprep.subr.mxu0 0.0
    %332 = vmatpush1.msra.mxu0 0.0
    %333 = vmatprep.subr.mxu0 0.0
    %334 = vmatpush1.msra.mxu0 0.0
    %335 = vmatprep.subr.mxu0 0.0
    %336 = vmatpush1.msra.mxu0 0.0
    %337 = vmatprep.subr.mxu0 0.0
    %338 = vmatpush1.msra.mxu0 0.0
    %339 = vmatprep.subr.mxu0 0.0
    %340 = vmatpush1.msra.mxu0 0.0
    %341 = vmatprep.subr.mxu0 0.0
    %342 = vmatpush1.msra.mxu0 0.0
    %343 = vmatprep.subr.mxu0 0.0
    %344 = vmatpush1.msra.mxu0 0.0
    %345 = vmatprep.subr.mxu0 0.0
    %346 = vmatpush1.msra.mxu0 0.0
    %347 = vmatprep.subr.mxu0 0.0
    %348 = vmatpush1.msra.mxu0 0.0
    %349 = vmatprep.mubr.f32.mxu0 0.0
    %350 = vmatmul.mubr.f32.gmra.mrb[0].mxu0 %v246
    %v351 = vpop.f32.mrb[0].mxu0
    %v352 = vadd.f32 %v283, %v351
    %v353 = vpop.f32.mrb[0].mxu0
    %354 = vmatprep.mubr.f32.mxu0 0.0
    %355 = vmatmul.mubr.f32.gmra.mrb[0].mxu0 %v247
    %v356 = vpop.f32.mrb[0].mxu0
    %v357 = vadd.f32 %v283, %v356
    %v358 = vpop.f32.mrb[0].mxu0
    %359 = vmatprep.mubr.f32.mxu0 0.0
    %360 = vmatmul.mubr.f32.gmra.mrb[0].mxu0 %v248
    %v361 = vpop.f32.mrb[0].mxu0
    %v362 = vadd.f32 %v283, %v361
    %v363 = vpop.f32.mrb[0].mxu0
    %364 = vmatprep.mubr.f32.mxu0 0.0
    %365 = vmatmul.mubr.f32.gmra.mrb[0].mxu0 %v249
    %v366 = vpop.f32.mrb[0].mxu0
    %v367 = vadd.f32 %v283, %v366
    %v368 = vpop.f32.mrb[0].mxu0
    %369 = vmatprep.mubr.f32.mxu0 0.0
    %370 = vmatmul.mubr.f32.gmra.mrb[0].mxu0 %v250
    %v371 = vpop.f32.mrb[0].mxu0
    %v372 = vadd.f32 %v283, %v371
    %v373 = vpop.f32.mrb[0].mxu0
    %374 = vmatprep.mubr.f32.mxu0 0.0
    %375 = vmatmul.mubr.f32.gmra.mrb[0].mxu0 %v251
    %v376 = vpop.f32.mrb[0].mxu0
    %v377 = vadd.f32 %v283, %v376
    %v378 = vpop.f32.mrb[0].mxu0
    %379 = vmatprep.mubr.f32.mxu0 0.0
    %380 = vmatmul.mubr.f32.gmra.mrb[0].mxu0 %v252
    %v381 = vpop.f32.mrb[0].mxu0
    %v382 = vadd.f32 %v283, %v381
    %v383 = vpop.f32.mrb[0].mxu0
    %384 = vmatprep.mubr.f32.mxu0 0.0
    %385 = vmatmul.mubr.f32.gmra.mrb[0].mxu0 %v253
    %v386 = vpop.f32.mrb[0].mxu0
    %v387 = vadd.f32 %v283, %v386
    %v388 = vpop.f32.mrb[0].mxu0
    %389 = vmatprep.mubr.f32.mxu0 0.0
    %390 = vmatmul.mubr.f32.gmra.mrb[0].mxu0 %v254
    %v391 = vpop.f32.mrb[0].mxu0
    %v392 = vadd.f32 %v283, %v391
    %v393 = vpop.f32.mrb[0].mxu0
    %394 = vmatprep.mubr.f32.mxu0 0.0
    %395 = vmatmul.mubr.f32.gmra.mrb[0].mxu0 %v255
    %v396 = vpop.f32.mrb[0].mxu0
    %v397 = vadd.f32 %v283, %v396
    %v398 = vpop.f32.mrb[0].mxu0
    %399 = vmatprep.mubr.f32.mxu0 0.0
    %400 = vmatmul.mubr.f32.gmra.mrb[0].mxu0 %v256
    %v401 = vpop.f32.mrb[0].mxu0
    %v402 = vadd.f32 %v283, %v401
    %v403 = vpop.f32.mrb[0].mxu0
    %404 = vmatprep.mubr.f32.mxu0 0.0
    %405 = vmatmul.mubr.f32.gmra.mrb[0].mxu0 %v257
    %v406 = vpop.f32.mrb[0].mxu0
    %v407 = vadd.f32 %v283, %v406
    %v408 = vpop.f32.mrb[0].mxu0
    %409 = vmatprep.mubr.f32.mxu0 0.0
    %410 = vmatmul.mubr.f32.gmra.mrb[0].mxu0 %v258
    %v411 = vpop.f32.mrb[0].mxu0
    %v412 = vadd.f32 %v283, %v411
    %v413 = vpop.f32.mrb[0].mxu0
    %414 = vmatprep.mubr.f32.mxu0 0.0
    %415 = vmatmul.mubr.f32.gmra.mrb[0].mxu0 %v259
    %v416 = vpop.f32.mrb[0].mxu0
    %v417 = vadd.f32 %v283, %v416
    %v418 = vpop.f32.mrb[0].mxu0
    %419 = vmatprep.mubr.f32.mxu0 0.0
    %420 = vmatmul.mubr.f32.gmra.mrb[0].mxu0 %v260
    %v421 = vpop.f32.mrb[0].mxu0
    %v422 = vadd.f32 %v283, %v421
    %v423 = vpop.f32.mrb[0].mxu0
    %424 = vmatprep.mubr.f32.mxu0 0.0
    %425 = vmatmul.mubr.f32.gmra.mrb[0].mxu0 %v261
    %v426 = vpop.f32.mrb[0].mxu0
    %v427 = vadd.f32 %v283, %v426
    %v428 = vpop.f32.mrb[0].mxu0
    %429 = vdwg.mxu0
    %430 = vmax.xlane.f32.xlu0 %v352
    %v431 = vpop.xlane.xlu0 %430
    %432 = vmax.xlane.f32.xlu0 %v357
    %v433 = vpop.xlane.xlu0 %432
    %434 = vmax.xlane.f32.xlu0 %v362
    %v435 = vpop.xlane.xlu0 %434
    %436 = vmax.xlane.f32.xlu0 %v367
    %v437 = vpop.xlane.xlu0 %436
    %438 = vmax.xlane.f32.xlu0 %v372
    %v439 = vpop.xlane.xlu0 %438
    %440 = vmax.xlane.f32.xlu0 %v377
    %v441 = vpop.xlane.xlu0 %440
    %442 = vmax.xlane.f32.xlu0 %v382
    %v443 = vpop.xlane.xlu0 %442
    %444 = vmax.xlane.f32.xlu0 %v387
    %v445 = vpop.xlane.xlu0 %444
    %446 = vmax.xlane.f32.xlu0 %v392
    %v447 = vpop.xlane.xlu0 %446
    %448 = vmax.xlane.f32.xlu0 %v397
    %v449 = vpop.xlane.xlu0 %448
    %450 = vmax.xlane.f32.xlu0 %v402
    %v451 = vpop.xlane.xlu0 %450
    %452 = vmax.xlane.f32.xlu0 %v407
    %v453 = vpop.xlane.xlu0 %452
    %454 = vmax.xlane.f32.xlu0 %v412
    %v455 = vpop.xlane.xlu0 %454
    %456 = vmax.xlane.f32.xlu0 %v417
    %v457 = vpop.xlane.xlu0 %456
    %458 = vmax.xlane.f32.xlu0 %v422
    %v459 = vpop.xlane.xlu0 %458
    %460 = vmax.xlane.f32.xlu0 %v427
    %v461 = vpop.xlane.xlu0 %460
    %v462 = vsub.f32 %v352, %v431
    %v463 = vsub.f32 %v357, %v433
    %v464 = vsub.f32 %v362, %v435
    %v465 = vsub.f32 %v367, %v437
    %v466 = vsub.f32 %v372, %v439
    %v467 = vsub.f32 %v377, %v441
    %v468 = vsub.f32 %v382, %v443
    %v469 = vsub.f32 %v387, %v445
    %v470 = vsub.f32 %v392, %v447
    %v471 = vsub.f32 %v397, %v449
    %v472 = vsub.f32 %v402, %v451
    %v473 = vsub.f32 %v407, %v453
    %v474 = vsub.f32 %v412, %v455
    %v475 = vsub.f32 %v417, %v457
    %v476 = vsub.f32 %v422, %v459
    %v477 = vsub.f32 %v427, %v461
    %v478 = vmul.f32 %v462, 1.442695
    %v479 = vpow.pop %v478
    %v480 = vmul.f32 %v463, 1.442695
    %v481 = vpow.pop %v480
    %v482 = vmul.f32 %v464, 1.442695
    %v483 = vpow.pop %v482
    %v484 = vmul.f32 %v465, 1.442695
    %v485 = vpow.pop %v484
    %v486 = vmul.f32 %v466, 1.442695
    %v487 = vpow.pop %v486
    %v488 = vmul.f32 %v467, 1.442695
    %v489 = vpow.pop %v488
    %v490 = vmul.f32 %v468, 1.442695
    %v491 = vpow.pop %v490
    %v492 = vmul.f32 %v469, 1.442695
    %v493 = vpow.pop %v492
    %v494 = vmul.f32 %v470, 1.442695
    %v495 = vpow.pop %v494
    %v496 = vmul.f32 %v471, 1.442695
    %v497 = vpow.pop %v496
    %v498 = vmul.f32 %v472, 1.442695
    %v499 = vpow.pop %v498
    %v500 = vmul.f32 %v473, 1.442695
    %v501 = vpow.pop %v500
    %v502 = vmul.f32 %v474, 1.442695
    %v503 = vpow.pop %v502
    %v504 = vmul.f32 %v475, 1.442695
    %v505 = vpow.pop %v504
    %v506 = vmul.f32 %v476, 1.442695
    %v507 = vpow.pop %v506
    %v508 = vmul.f32 %v477, 1.442695
    %v509 = vpow.pop %v508
    %510 = vadd.xlane.f32.xlu0 %v479
    %v511 = vpop.xlane.xlu0 %510
    %512 = vadd.xlane.f32.xlu0 %v481
    %v513 = vpop.xlane.xlu0 %512
    %514 = vadd.xlane.f32.xlu0 %v483
    %v515 = vpop.xlane.xlu0 %514
    %516 = vadd.xlane.f32.xlu0 %v485
    %v517 = vpop.xlane.xlu0 %516
    %518 = vadd.xlane.f32.xlu0 %v487
    %v519 = vpop.xlane.xlu0 %518
    %520 = vadd.xlane.f32.xlu0 %v489
    %v521 = vpop.xlane.xlu0 %520
    %522 = vadd.xlane.f32.xlu0 %v491
    %v523 = vpop.xlane.xlu0 %522
    %524 = vadd.xlane.f32.xlu0 %v493
    %v525 = vpop.xlane.xlu0 %524
    %526 = vadd.xlane.f32.xlu0 %v495
    %v527 = vpop.xlane.xlu0 %526
    %528 = vadd.xlane.f32.xlu0 %v497
    %v529 = vpop.xlane.xlu0 %528
    %530 = vadd.xlane.f32.xlu0 %v499
    %v531 = vpop.xlane.xlu0 %530
    %532 = vadd.xlane.f32.xlu0 %v501
    %v533 = vpop.xlane.xlu0 %532
    %534 = vadd.xlane.f32.xlu0 %v503
    %v535 = vpop.xlane.xlu0 %534
    %536 = vadd.xlane.f32.xlu0 %v505
    %v537 = vpop.xlane.xlu0 %536
    %538 = vadd.xlane.f32.xlu0 %v507
    %v539 = vpop.xlane.xlu0 %538
    %540 = vadd.xlane.f32.xlu0 %v509
    %v541 = vpop.xlane.xlu0 %540
    %v542 = vlog2.pop %v511
    %v543 = vmul.f32 %v542, 0.6931472
    %v544 = vlog2.pop %v513
    %v545 = vmul.f32 %v544, 0.6931472
    %v546 = vlog2.pop %v515
    %v547 = vmul.f32 %v546, 0.6931472
    %v548 = vlog2.pop %v517
    %v549 = vmul.f32 %v548, 0.6931472
    %v550 = vlog2.pop %v519
    %v551 = vmul.f32 %v550, 0.6931472
    %v552 = vlog2.pop %v521
    %v553 = vmul.f32 %v552, 0.6931472
    %v554 = vlog2.pop %v523
    %v555 = vmul.f32 %v554, 0.6931472
    %v556 = vlog2.pop %v525
    %v557 = vmul.f32 %v556, 0.6931472
    %v558 = vlog2.pop %v527
    %v559 = vmul.f32 %v558, 0.6931472
    %v560 = vlog2.pop %v529
    %v561 = vmul.f32 %v560, 0.6931472
    %v562 = vlog2.pop %v531
    %v563 = vmul.f32 %v562, 0.6931472
    %v564 = vlog2.pop %v533
    %v565 = vmul.f32 %v564, 0.6931472
    %v566 = vlog2.pop %v535
    %v567 = vmul.f32 %v566, 0.6931472
    %v568 = vlog2.pop %v537
    %v569 = vmul.f32 %v568, 0.6931472
    %v570 = vlog2.pop %v539
    %v571 = vmul.f32 %v570, 0.6931472
    %v572 = vlog2.pop %v541
    %v573 = vmul.f32 %v572, 0.6931472
    %v574 = vsub.f32 %v462, %v543
    %v575 = vsub.f32 %v463, %v545
    %v576 = vsub.f32 %v464, %v547
    %v577 = vsub.f32 %v465, %v549
    %v578 = vsub.f32 %v466, %v551
    %v579 = vsub.f32 %v467, %v553
    %v580 = vsub.f32 %v468, %v555
    %v581 = vsub.f32 %v469, %v557
    %v582 = vsub.f32 %v470, %v559
    %v583 = vsub.f32 %v471, %v561
    %v584 = vsub.f32 %v472, %v563
    %v585 = vsub.f32 %v473, %v565
    %v586 = vsub.f32 %v474, %v567
    %v587 = vsub.f32 %v475, %v569
    %v588 = vsub.f32 %v476, %v571
    %v589 = vsub.f32 %v477, %v573
    %590 = vst [vmem:[#allocation8] sm:$0xff] %v574
    %591 = vst [vmem:[#allocation8 + $0x8] sm:$0xff] %v575
    %592 = vst [vmem:[#allocation8 + $0x10] sm:$0xff] %v576
    %593 = vst [vmem:[#allocation8 + $0x18] sm:$0xff] %v577
    %594 = vst [vmem:[#allocation8 + $0x20] sm:$0xff] %v578
    %595 = vst [vmem:[#allocation8 + $0x28] sm:$0xff] %v579
    %596 = vst [vmem:[#allocation8 + $0x30] sm:$0xff] %v580
    %597 = vst [vmem:[#allocation8 + $0x38] sm:$0xff] %v581
    %598 = vst [vmem:[#allocation8 + $0x40] sm:$0xff] %v582
    %599 = vst [vmem:[#allocation8 + $0x48] sm:$0xff] %v583
    %600 = vst [vmem:[#allocation8 + $0x50] sm:$0xff] %v584
    %601 = vst [vmem:[#allocation8 + $0x58] sm:$0xff] %v585
    %602 = vst [vmem:[#allocation8 + $0x60] sm:$0xff] %v586
    %603 = vst [vmem:[#allocation8 + $0x68] sm:$0xff] %v587
    %604 = vst [vmem:[#allocation8 + $0x70] sm:$0xff] %v588
    %605 = vst [vmem:[#allocation8 + $0x78] sm:$0xff] %v589
    // Predicated region
    $region34: #{tpu_custom_call.1} parent=1 // pred_check
      _
    $region35: #{tpu_custom_call.1} parent=1 // pred_check_branch
      %607 = sbr.rel (0) target = $region37
    $region36: #{tpu_custom_call.1} parent=1 // pred_region
      %s609 = ssub.s32 2048, 2048
      %610 = vsyncadd [#allocation4], %s609
      %s611 = sshll.u32 [#allocation8], 4
      %s612 = int_to_ptr.vmem [resolvable:$true] %s611
      %617 = dma.vmem_to_hbm [thread:$0]  %s612, 2048, %s5, [#allocation4], 128, 128, 8
    $region37: #{tpu_custom_call.1} parent=1 // pred_fallthru
      _
    // Predicated region
    $region38: #{tpu_custom_call.1} parent=1 // pred_check
      _
    $region39: #{tpu_custom_call.1} parent=1 // pred_check_branch
      %619 = sbr.rel (0) target = $region41
    $region40: #{tpu_custom_call.1} parent=1 // pred_region
      %620 = dma.done [#allocation4], 2048
    $region41: #{tpu_custom_call.1} parent=1 // pred_fallthru
      _
    %621 = vsyncpa [#allocation3], 1
    %622 = vsyncpa [#allocation6], 1
    %623 = vsyncpa [#allocation4], 1

</llo_original>
